<compile_context>
chip_gen: v5e
topology: v5e:2x2
jax: 0.10.0
libtpu: 0.0.40
codegen_flags: <defaults>
</compile_context>

<pallas_src>
import jax
import jax.numpy as jnp
from jax.experimental import pallas as pl
from jax.experimental.pallas import tpu as pltpu

LANES = 128  # vreg lane width


def mlp_kernel(params_ref, x_ref, o_ref):
    # params_ref (scalar-prefetch, SMEM): [w00, w01, b10, b11, w20, w21, b2, pad]
    w00 = params_ref[0]
    w01 = params_ref[1]
    b10 = params_ref[2]
    b11 = params_ref[3]
    w20 = params_ref[4]
    w21 = params_ref[5]
    b2 = params_ref[6]

    x = x_ref[...]                               # (tb, 128) f32, lane-dense
    h0 = jnp.maximum(x * w00 + b10, 0.0)         # hidden unit 0 (VPU)
    h1 = jnp.maximum(x * w01 + b11, 0.0)         # hidden unit 1 (VPU)
    o_ref[...] = h0 * w20 + h1 * w21 + b2        # unmasked lane-dense store


def _pallas_lane_dense(x2d, params, *, block_rows):
    """x2d: (rows, 128) f32 lane-dense view. Returns (rows, 128) f32."""
    rows = x2d.shape[0]

    # Tile rows: multiple of 8 sublanes, aim for >=4 grid steps (v7x megacore +
    # pipeline overlap), capped by block_rows and by the (rounded) row count.
    tb = ((pl.cdiv(rows, 4) + 7) // 8) * 8
    tb = max(8, min(tb, block_rows, ((rows + 7) // 8) * 8))
    grid = (pl.cdiv(rows, tb),)  # partial last block: OOB reads ignored, writes masked

    return pl.pallas_call(
        mlp_kernel,
        out_shape=jax.ShapeDtypeStruct((rows, LANES), jnp.float32),
        grid_spec=pltpu.PrefetchScalarGridSpec(
            num_scalar_prefetch=1,
            grid=grid,
            in_specs=[pl.BlockSpec((tb, LANES), lambda i, p: (i, 0))],
            out_specs=pl.BlockSpec((tb, LANES), lambda i, p: (i, 0)),
        ),
        compiler_params=pltpu.CompilerParams(
            dimension_semantics=("parallel",),
        ),
        cost_estimate=pl.CostEstimate(
            flops=5 * rows * LANES,
            transcendentals=0,
            bytes_accessed=8 * rows * LANES,  # read x + write out, f32
        ),
    )(params, x2d)


def complex_model_forward(x, w1, b1, w2, b2, *, block_rows=2048, min_pallas_elems=4096):
    """x: (B, 1). w1: (1, 2), b1: (1, 2), w2: (2, 1), b2: (1, 1). Returns (B, 1)."""
    B = x.shape[0]
    x = x.astype(jnp.float32)  # kernel layout assumes f32 (8,128) tiles

    w00 = w1[0, 0].astype(jnp.float32)
    w01 = w1[0, 1].astype(jnp.float32)
    b10 = b1[0, 0].astype(jnp.float32)
    b11 = b1[0, 1].astype(jnp.float32)
    w20 = w2[0, 0].astype(jnp.float32)
    w21 = w2[1, 0].astype(jnp.float32)
    bb2 = b2[0, 0].astype(jnp.float32)

    # Small-batch bypass: pallas_call fixed overhead dominates; XLA fuses these
    # 5 elementwise ops into a single kernel that is already roofline-bound.
    if B < min_pallas_elems:
        h0 = jnp.maximum(x * w00 + b10, 0.0)
        h1 = jnp.maximum(x * w01 + b11, 0.0)
        return h0 * w20 + h1 * w21 + bb2

    # Pack the 7 scalars for SMEM scalar-prefetch (pad to 8 entries).
    params = jnp.stack([w00, w01, b10, b11, w20, w21, bb2, jnp.float32(0.0)])

    if B % LANES == 0:
        # Fast path: lane-dense view is a free reshape; no pad, no output slice.
        x2d = x.reshape(B // LANES, LANES)
        out2d = _pallas_lane_dense(x2d, params, block_rows=block_rows)
        return out2d.reshape(B, 1)

    # Ragged large batch: pad flat view to a lane multiple, slice the result.
    rows = pl.cdiv(B, LANES)
    xf = jnp.pad(x.reshape(-1), (0, rows * LANES - B))
    out2d = _pallas_lane_dense(xf.reshape(rows, LANES), params, block_rows=block_rows)
    return out2d.reshape(-1)[:B].reshape(B, 1)


def init_params(key):
    # PyTorch nn.Linear shapes:
    #   linear:  weight (2, 1), bias (2,)  -> stored here as w1 (1, 2), b1 (1, 2)
    #   linear2: weight (1, 2), bias (1,)  -> stored here as w2 (2, 1), b2 (1, 1)
    k1, k2, k3, k4 = jax.random.split(key, 4)
    lim1 = 1.0 / jnp.sqrt(1.0)   # fan_in = 1
    lim2 = 1.0 / jnp.sqrt(2.0)   # fan_in = 2
    w1 = jax.random.uniform(k1, (1, 2), jnp.float32, -lim1, lim1)
    b1 = jax.random.uniform(k2, (1, 2), jnp.float32, -lim1, lim1)
    w2 = jax.random.uniform(k3, (2, 1), jnp.float32, -lim2, lim2)
    b2 = jax.random.uniform(k4, (1, 1), jnp.float32, -lim2, lim2)
    return w1, b1, w2, b2


def reference_forward(x, w1, b1, w2, b2):
    h = jnp.maximum(x @ w1 + b1, 0.0)
    return h @ w2 + b2


if __name__ == "__main__":
    key = jax.random.PRNGKey(0)
    k_x, k_p = jax.random.split(key)
    w1, b1, w2, b2 = init_params(k_p)

    # 1) Pallas fast path (B multiple of 128, above the bypass threshold).
    B = 8192
    x = jax.random.normal(k_x, (B, 1), dtype=jnp.float32)
    out = jax.block_until_ready(complex_model_forward(x, w1, b1, w2, b2))
    ref = reference_forward(x, w1, b1, w2, b2)
    assert out.shape == (B, 1)
    assert jnp.allclose(out, ref, atol=1e-5, rtol=1e-5)

    # 2) Ragged large batch (pad + slice fallback path through the kernel).
    Br = 8229
    xr = jax.random.normal(jax.random.PRNGKey(1), (Br, 1), dtype=jnp.float32)
    outr = jax.block_until_ready(complex_model_forward(xr, w1, b1, w2, b2))
    refr = reference_forward(xr, w1, b1, w2, b2)
    assert outr.shape == (Br, 1)
    assert jnp.allclose(outr, refr, atol=1e-5, rtol=1e-5)

    # 3) Small-batch bypass (fused XLA elementwise path).
    Bs = 37
    xs = jax.random.normal(jax.random.PRNGKey(2), (Bs, 1), dtype=jnp.float32)
    outs = jax.block_until_ready(complex_model_forward(xs, w1, b1, w2, b2))
    refs = reference_forward(xs, w1, b1, w2, b2)
    assert outs.shape == (Bs, 1)
    assert jnp.allclose(outs, refs, atol=1e-5, rtol=1e-5)

    print("KERNEL_OK")
</pallas_src>

<mosaic_0001>
module attributes {stable_mosaic.version = 11 : i64} {
  func.func @mlp_kernel(%arg0: i32, %arg1: memref<8xf32, #tpu.memory_space<smem>>, %arg2: memref<16x128xf32, #tpu.memory_space<vmem>>, %arg3: memref<16x128xf32, #tpu.memory_space<vmem>>) attributes {dimension_semantics = [#tpu.dimension_semantics<parallel>], iteration_bounds = array<i64: 4>, scalar_prefetch = 1 : i64, scratch_operands = 0 : i64, tpu.core_type = #tpu.core_type<tc>, window_params = [{transform_indices = @transform_0, window_bounds = array<i64: 16, 128>}, {transform_indices = @transform_1, window_bounds = array<i64: 16, 128>}]} {
    %c0 = arith.constant 0 : index
    %0 = memref.load %arg1[%c0] : memref<8xf32, #tpu.memory_space<smem>>
    %c1 = arith.constant 1 : index
    %1 = memref.load %arg1[%c1] : memref<8xf32, #tpu.memory_space<smem>>
    %c2 = arith.constant 2 : index
    %2 = memref.load %arg1[%c2] : memref<8xf32, #tpu.memory_space<smem>>
    %c3 = arith.constant 3 : index
    %3 = memref.load %arg1[%c3] : memref<8xf32, #tpu.memory_space<smem>>
    %c4 = arith.constant 4 : index
    %4 = memref.load %arg1[%c4] : memref<8xf32, #tpu.memory_space<smem>>
    %c5 = arith.constant 5 : index
    %5 = memref.load %arg1[%c5] : memref<8xf32, #tpu.memory_space<smem>>
    %c6 = arith.constant 6 : index
    %6 = memref.load %arg1[%c6] : memref<8xf32, #tpu.memory_space<smem>>
    %c0_0 = arith.constant 0 : index
    %c0_1 = arith.constant 0 : index
    %7 = vector.load %arg2[%c0_0, %c0_1] : memref<16x128xf32, #tpu.memory_space<vmem>>, vector<16x128xf32>
    %8 = vector.broadcast %0 : f32 to vector<16x128xf32>
    %9 = arith.mulf %7, %8 : vector<16x128xf32>
    %10 = vector.broadcast %2 : f32 to vector<16x128xf32>
    %11 = arith.addf %9, %10 : vector<16x128xf32>
    %cst = arith.constant 0.000000e+00 : f32
    %12 = vector.broadcast %cst : f32 to vector<16x128xf32>
    %13 = arith.maximumf %11, %12 : vector<16x128xf32>
    %14 = vector.broadcast %1 : f32 to vector<16x128xf32>
    %15 = arith.mulf %7, %14 : vector<16x128xf32>
    %16 = vector.broadcast %3 : f32 to vector<16x128xf32>
    %17 = arith.addf %15, %16 : vector<16x128xf32>
    %cst_2 = arith.constant 0.000000e+00 : f32
    %18 = vector.broadcast %cst_2 : f32 to vector<16x128xf32>
    %19 = arith.maximumf %17, %18 : vector<16x128xf32>
    %20 = vector.broadcast %4 : f32 to vector<16x128xf32>
    %21 = arith.mulf %13, %20 : vector<16x128xf32>
    %22 = vector.broadcast %5 : f32 to vector<16x128xf32>
    %23 = arith.mulf %19, %22 : vector<16x128xf32>
    %24 = arith.addf %21, %23 : vector<16x128xf32>
    %25 = vector.broadcast %6 : f32 to vector<16x128xf32>
    %26 = arith.addf %24, %25 : vector<16x128xf32>
    %c0_3 = arith.constant 0 : index
    %c0_4 = arith.constant 0 : index
    %27 = vector.load %arg3[%c0_3, %c0_4] : memref<16x128xf32, #tpu.memory_space<vmem>>, vector<16x128xf32>
    tpu.vector_store %arg3[%c0_3, %c0_4], %26 {strides = array<i32>} : memref<16x128xf32, #tpu.memory_space<vmem>>, vector<16x128xf32>,
    return
  }
  func.func @transform_0(%arg0: i32, %arg1: memref<8xf32, #tpu.memory_space<smem>>) -> (i32, i32) {
    %c0_i32 = arith.constant 0 : i32
    %c0_i32_0 = arith.constant 0 : i32
    return %arg0, %c0_i32 : i32, i32
  }
  func.func @transform_1(%arg0: i32, %arg1: memref<8xf32, #tpu.memory_space<smem>>) -> (i32, i32) {
    %c0_i32 = arith.constant 0 : i32
    %c0_i32_0 = arith.constant 0 : i32
    return %arg0, %c0_i32 : i32, i32
  }
}

</mosaic_0001>

<llo_original>
// kernel: tpu_custom_call.1
$region0: #{tpu_custom_call.1}
  #allocation0 [shape = 'u32[]', space=smem, size = 0x4, offset = 0x4, fixed_abs, tag = 'smem constant byte address 0x4 - core index']
  #allocation1 [shape = 'u32[72,128]{1,0:T(1,128)}', space=vmem, size = 0x9000, scoped, tag = 'internal scratch']
  #allocation2 [shape = 's32[1]{0}', space=sflag, size = 0x4, scoped, tag = 'scoped memory for tpu_custom_call.1']
  #allocation3 [shape = 'u8[512]{0}', space=smem, size = 0x200, scoped, tag = 'prefetched SMEM operand 0']
  %s0 = inlined_call_operand.hbm [shape: f32[8], index: 0, kind: input, shape index: {}]
  %s1 = inlined_call_operand.hbm [shape: f32[64,128], index: 1, kind: input, shape index: {}]
  %s2 = inlined_call_operand.hbm [shape: f32[64,128], index: 2, kind: output, shape index: {}]
  %s3 = sld [smem:[#allocation0]]
  $region41: #{tpu_custom_call.1} parent=0
    _
  %s5 = ssub.s32 1, %s3
  %s6 = scalar_select 0, %s5, %s3
  %s8 = sshll.u32 %s0, 4
  %s9 = int_to_ptr.hbm [resolvable:$true] %s8
  %11 = dma.hbm_to_smem %s9, 16, [#allocation3], [#allocation2]
  %13 = dma.done [#allocation2], 16
  %14 = sfence
  $region1: #{tpu_custom_call.1} parent=0
    #allocation4 [shape = 'u8[16384]{0}', space=vmem, size = 0x4000, scoped, tag = 'input window, operand 1']
    #allocation5 [shape = 's32[2]{0}', space=sflag, size = 0x8, scoped, tag = 'scoped memory for tpu_custom_call.1']
    #allocation6 [shape = 's32[2]{0}', space=sflag, size = 0x8, scoped, tag = 'scoped memory for tpu_custom_call.1']
    #allocation7 [shape = 'u8[16384]{0}', space=vmem, size = 0x4000, scoped, tag = 'output window, operand 0']
    %15 = vsyncpa [#allocation5], 0
    %s16 = scalar_lea.sflag [#allocation5], 1
    %17 = vsyncpa %s16, 0
    %18 = vsyncpa [#allocation6], 0
    %s19 = scalar_lea.sflag [#allocation6], 1
    %20 = vsyncpa %s19, 0
    loop: start=0, step=1, limit=6
    $region2: #{tpu_custom_call.1} parent=1 // loop_pre_header
      _
    $region3: #{tpu_custom_call.1} parent=1 // loop_header
      %s22 = sphi 0, %s26
      %p23 = scmp.ge.s32.totalorder %s22, 6
      %s32 = sphi 0, %s34
      %s35 = sphi 0, %s32
      %s36 = sphi 0, %s35
      %s52 = sphi 0, %s36
      %s58 = sphi 0, %s60
      %s61 = sphi 0, %s58
      %s62 = sphi 0, %s61
      %s78 = sphi 0, %s62
    $region4: #{tpu_custom_call.1} parent=1 // loop_header_branch
      %25 = sbr.rel (%p23) target = $region8
    $region5: #{tpu_custom_call.1} parent=1 // loop_body
      %s27 = ssub.s32 %s22, 1
      %s28 = ssub.s32 %s22, 2
      %s29 = sadd.s32 %s22, 1
      %s30 = ssub.s32 %s22, %s29
      %p31 = scmp.eq.s32.totalorder %s30, 0
      %s33 = sadd.s32 %s32, 1
      %s34 = scalar_select %p31, %s32, %s33
      %p37 = pneg %p31
      %p38 = scmp.eq.s32.totalorder %s22, 3
      %p39 = por %p37, %p38
      %p40 = scmp.ne.s32.totalorder %s32, %s35
      %p41 = scmp.eq.s32.totalorder %s22, 0
      %p42 = por %p40, %p41
      %p43 = scmp.ne.s32.totalorder %s32, %s35
      %p44 = scmp.eq.s32.totalorder %s27, 3
      %p45 = por %p43, %p44
      %p46 = scmp.ne.s32.totalorder %s35, %s36
      %p47 = scmp.eq.s32.totalorder %s27, 0
      %p48 = por %p46, %p47
      %p49 = scmp.ne.s32.totalorder %s35, %s36
      %p50 = scmp.eq.s32.totalorder %s28, 3
      %p51 = por %p49, %p50
      %p53 = scmp.ne.s32.totalorder %s36, %s52
      %p54 = scmp.eq.s32.totalorder %s28, 0
      %p55 = por %p53, %p54
      %s56 = ssub.s32 %s22, %s29
      %p57 = scmp.eq.s32.totalorder %s56, 0
      %s59 = sadd.s32 %s58, 1
      %s60 = scalar_select %p57, %s58, %s59
      %p63 = pneg %p57
      %p64 = scmp.eq.s32.totalorder %s22, 3
      %p65 = por %p63, %p64
      %p66 = scmp.ne.s32.totalorder %s58, %s61
      %p67 = scmp.eq.s32.totalorder %s22, 0
      %p68 = por %p66, %p67
      %p69 = scmp.ne.s32.totalorder %s58, %s61
      %p70 = scmp.eq.s32.totalorder %s27, 3
      %p71 = por %p69, %p70
      %p72 = scmp.ne.s32.totalorder %s61, %s62
      %p73 = scmp.eq.s32.totalorder %s27, 0
      %p74 = por %p72, %p73
      %p75 = scmp.ne.s32.totalorder %s61, %s62
      %p76 = scmp.eq.s32.totalorder %s28, 3
      %p77 = por %p75, %p76
      %p79 = scmp.ne.s32.totalorder %s62, %s78
      %p80 = scmp.eq.s32.totalorder %s28, 0
      %p81 = por %p79, %p80
      %p82 = scmp.le.s32.totalorder 1, %s22
      %p83 = scmp.lt.s32.totalorder %s22, 5
      %p84 = pnand %p82, %p83
      %p85 = pneg %p84
      // Predicated region
      $region9: #{tpu_custom_call.1} parent=5 // pred_check
        _
      $region10: #{tpu_custom_call.1} parent=5 // pred_check_branch
        %87 = sbr.rel (%p84) target = $region12
      $region11: #{tpu_custom_call.1} parent=5 // pred_region
        %s88 = ssub.s32 %s22, 1
      $region12: #{tpu_custom_call.1} parent=5 // pred_fallthru
        _
      %p89 = scmp.lt.s32.totalorder %s22, 4
      // Predicated region
      $region13: #{tpu_custom_call.1} parent=5 // pred_check
        %p90 = pneg %p89
      $region14: #{tpu_custom_call.1} parent=5 // pred_check_branch
        %92 = sbr.rel (%p90) target = $region16
      $region15: #{tpu_custom_call.1} parent=5 // pred_region
        // Predicated region
        $region17: #{tpu_custom_call.1} parent=15 // pred_check
          %p93 = pneg %p42
        $region18: #{tpu_custom_call.1} parent=15 // pred_check_branch
          %95 = sbr.rel (%p93) target = $region20
        $region19: #{tpu_custom_call.1} parent=15 // pred_region
          %s96 = sand.u32 %s32, 1
          %s97 = scalar_lea.sflag [#allocation5], %s96
          %s98 = sand.u32 %s32, 1
          %s99 = smul.addr %s98, 16
          %s100 = scalar_lea.vmem [#allocation4], %s99
          %s101 = smul.u32 2, %s22
          %103 = vsyncadd %s97, 0
          %s104 = smul.addr %s101, 8
          %s105 = scalar_lea.hbm %s1, %s104
          %s106 = sshll.u32 %s105, 4
          %s107 = int_to_ptr.hbm [resolvable:$true] %s106
          %s108 = sshll.u32 %s100, 4
          %s109 = int_to_ptr.vmem [resolvable:$true] %s108
          %114 = dma.hbm_to_vmem [thread:$0]  %s107, 256, %s109, %s97, 128, 128, 8
        $region20: #{tpu_custom_call.1} parent=15 // pred_fallthru
          _
      $region16: #{tpu_custom_call.1} parent=5 // pred_fallthru
        _
      %p115 = scmp.le.s32.totalorder 1, %s22
      %p116 = scmp.lt.s32.totalorder %s22, 5
      %p117 = pnand %p115, %p116
      %p118 = pneg %p117
      // Predicated region
      $region21: #{tpu_custom_call.1} parent=5 // pred_check
        _
      $region22: #{tpu_custom_call.1} parent=5 // pred_check_branch
        %120 = sbr.rel (%p117) target = $region24
      $region23: #{tpu_custom_call.1} parent=5 // pred_region
        %s121 = ssub.s32 %s22, 1
        %s122 = sand.u32 %s35, 1
        %s123 = scalar_lea.sflag [#allocation5], %s122
        %s124 = sand.u32 %s35, 1
        %s125 = smul.addr %s124, 16
        %s126 = scalar_lea.vmem [#allocation4], %s125
        // Predicated region
        $region25: #{tpu_custom_call.1} parent=23 // pred_check
          %p127 = pneg %p48
        $region26: #{tpu_custom_call.1} parent=23 // pred_check_branch
          %129 = sbr.rel (%p127) target = $region28
        $region27: #{tpu_custom_call.1} parent=23 // pred_region
          %131 = dma.done %s123, 256
        $region28: #{tpu_custom_call.1} parent=23 // pred_fallthru
          _
        %s132 = sand.u32 %s35, 1
        %s133 = scalar_lea.sflag [#allocation5], %s132
        %s134 = sand.u32 %s35, 1
        %s135 = smul.addr %s134, 16
        %s136 = scalar_lea.vmem [#allocation4], %s135
        %p137 = pneg %p48
        %p138 = pneg %p45
        %p139 = pneg %p74
        %p140 = pneg %p71
        %s141 = sand.u32 %s61, 1
        %s142 = scalar_lea.sflag [#allocation6], %s141
        %s143 = sand.u32 %s61, 1
        %s144 = smul.addr %s143, 16
        %s145 = scalar_lea.vmem [#allocation7], %s144
        %s146 = smul.u32 2, %s27
        %s147 = smul.u32 2, %s27
        %s148 = sld [smem:[#allocation3]]
        %s149 = sld [smem:[#allocation3 + $0x1]]
        %s150 = sld [smem:[#allocation3 + $0x2]]
        %s151 = sld [smem:[#allocation3 + $0x3]]
        %s152 = sld [smem:[#allocation3 + $0x4]]
        %s153 = sld [smem:[#allocation3 + $0x5]]
        %s154 = sld [smem:[#allocation3 + $0x6]]
        %v155 = vld [vmem:[%s126] sm:$0xff]
        %v156 = vld [vmem:[%s126 + $0x8] sm:$0xff]
        %v157 = vstv %s148
        %v158 = vmul.f32 %v155, %v157
        %v159 = vmul.f32 %v156, %v157
        %v160 = vstv %s150
        %v161 = vadd.f32 %v158, %v160
        %v162 = vadd.f32 %v159, %v160
        %v163 = vmax.f32 %v161, 0.0
        %v164 = vmax.f32 %v162, 0.0
        %v165 = vstv %s149
        %v166 = vmul.f32 %v155, %v165
        %v167 = vmul.f32 %v156, %v165
        %v168 = vstv %s151
        %v169 = vadd.f32 %v166, %v168
        %v170 = vadd.f32 %v167, %v168
        %v171 = vmax.f32 %v169, 0.0
        %v172 = vmax.f32 %v170, 0.0
        %v173 = vstv %s152
        %v174 = vmul.f32 %v163, %v173
        %v175 = vmul.f32 %v164, %v173
        %v176 = vstv %s153
        %v177 = vmul.f32 %v171, %v176
        %v178 = vmul.f32 %v172, %v176
        %v179 = vadd.f32 %v174, %v177
        %v180 = vadd.f32 %v175, %v178
        %v181 = vstv %s154
        %v182 = vadd.f32 %v179, %v181
        %v183 = vadd.f32 %v180, %v181
        %184 = vst [vmem:[%s145] sm:$0xff] %v182
        %185 = vst [vmem:[%s145 + $0x8] sm:$0xff] %v183
        %s186 = sand.u32 %s61, 1
        %s187 = scalar_lea.sflag [#allocation6], %s186
        %s188 = sand.u32 %s61, 1
        %s189 = smul.addr %s188, 16
        %s190 = scalar_lea.vmem [#allocation7], %s189
        // Predicated region
        $region29: #{tpu_custom_call.1} parent=23 // pred_check
          %p191 = pneg %p71
        $region30: #{tpu_custom_call.1} parent=23 // pred_check_branch
          %193 = sbr.rel (%p191) target = $region32
        $region31: #{tpu_custom_call.1} parent=23 // pred_region
          %s194 = smul.u32 2, %s27
          %196 = vsyncadd %s187, 0
          %s197 = smul.addr %s194, 8
          %s198 = scalar_lea.hbm %s2, %s197
          %s199 = sshll.u32 %s190, 4
          %s200 = int_to_ptr.vmem [resolvable:$true] %s199
          %s201 = sshll.u32 %s198, 4
          %s202 = int_to_ptr.hbm [resolvable:$true] %s201
          %207 = dma.vmem_to_hbm [thread:$0]  %s200, 256, %s202, %s187, 128, 128, 8
        $region32: #{tpu_custom_call.1} parent=23 // pred_fallthru
          _
      $region24: #{tpu_custom_call.1} parent=5 // pred_fallthru
        _
      %p208 = scmp.le.s32.totalorder 2, %s22
      // Predicated region
      $region33: #{tpu_custom_call.1} parent=5 // pred_check
        %p209 = pneg %p208
      $region34: #{tpu_custom_call.1} parent=5 // pred_check_branch
        %211 = sbr.rel (%p209) target = $region36
      $region35: #{tpu_custom_call.1} parent=5 // pred_region
        %s212 = ssub.s32 %s22, 2
        // Predicated region
        $region37: #{tpu_custom_call.1} parent=35 // pred_check
          %p213 = pneg %p77
        $region38: #{tpu_custom_call.1} parent=35 // pred_check_branch
          %215 = sbr.rel (%p213) target = $region40
        $region39: #{tpu_custom_call.1} parent=35 // pred_region
          %s216 = sand.u32 %s62, 1
          %s217 = scalar_lea.sflag [#allocation6], %s216
          %s218 = sand.u32 %s62, 1
          %s219 = smul.addr %s218, 16
          %s220 = scalar_lea.vmem [#allocation7], %s219
          %222 = dma.done %s217, 256
        $region40: #{tpu_custom_call.1} parent=35 // pred_fallthru
          _
      $region36: #{tpu_custom_call.1} parent=5 // pred_fallthru
        _
    $region6: #{tpu_custom_call.1} parent=1 // loop_footer
      %s26 = sadd.s32 1, %s22
    $region7: #{tpu_custom_call.1} parent=1 // loop_footer_branch
      %21 = sbr.rel target = $region3
    $region8: #{tpu_custom_call.1} parent=1 // loop_exit
      _
    %223 = vsyncpa [#allocation5], 1
    %s224 = scalar_lea.sflag [#allocation5], 1
    %225 = vsyncpa %s224, 1
    %226 = vsyncpa [#allocation6], 1
    %s227 = scalar_lea.sflag [#allocation6], 1
    %228 = vsyncpa %s227, 1

</llo_original>
